<compile_context>
chip_gen: v6e
topology: v6e:2x2x1
jax: 0.10.0
libtpu: 0.0.40
codegen_flags: <defaults>
</compile_context>

<pallas_src>
import jax
import jax.numpy as jnp
from jax.experimental import pallas as pl
from jax.experimental.pallas import tpu as pltpu


def _round_up(x, m):
    return ((x + m - 1) // m) * m


def _cls_head_kernel(x_ref, w1_ref, b1_ref, w2_ref, b2_ref, o_ref):
    # x_ref:  (TM, H)  matmul dtype (bf16 by default)
    # w1_ref: (H, MID) matmul dtype    b1_ref: (1, MID) f32
    # w2_ref: (MID, H) matmul dtype    b2_ref: (1, H)   f32
    # o_ref:  (TM, H)  output dtype (f32)
    x = x_ref[...]

    # Linear 1: MXU matmul with f32 accumulation, bias add in f32.
    h = jnp.dot(x, w1_ref[...], preferred_element_type=jnp.float32) + b1_ref[...]

    # Exact (erf-based) GELU, matching torch.nn.GELU(approximate='none').
    # TODO(synk): switch to tanh-approx GELU (EUP) if profiling shows the VPU
    # erf polynomial is the saturated slot and the accuracy contract allows it.
    inv_sqrt2 = jnp.float32(0.7071067811865476)
    g = 0.5 * h * (1.0 + jax.lax.erf(h * inv_sqrt2))

    # Linear 2: feed the MXU in the matmul dtype again, f32 accumulation,
    # f32 bias epilogue.
    out = jnp.dot(g.astype(w2_ref.dtype), w2_ref[...],
                  preferred_element_type=jnp.float32) + b2_ref[...]
    o_ref[...] = out.astype(o_ref.dtype)


def simple_cls_head(x, w1, b1, w2, b2, *, block_m=512, matmul_dtype=jnp.bfloat16):
    """x: (B, S, H). w1: (H, 384), b1: (384,), w2: (384, H), b2: (H,).

    Returns (B, S, H) in x.dtype.
    """
    B, S, H = x.shape
    mid = w1.shape[1]
    M = B * S
    out_dtype = x.dtype

    # Row tile: multiple of 8 (sublane), capped at block_m; pad M so every
    # grid step processes an identical full tile.
    tm = min(block_m, _round_up(M, 8))
    m_pad = _round_up(M, tm)
    grid_m = m_pad // tm

    x2d = x.reshape(M, H).astype(matmul_dtype)
    if m_pad != M:
        x2d = jnp.pad(x2d, ((0, m_pad - M), (0, 0)))

    # Cast weights once in the wrapper -> resident VMEM copies are half-width.
    w1c = w1.astype(matmul_dtype)
    w2c = w2.astype(matmul_dtype)
    # Biases stay f32 for the f32 epilogue.
    b1_2d = b1.reshape(1, mid).astype(jnp.float32)
    b2_2d = b2.reshape(1, H).astype(jnp.float32)

    itemsize = lambda a: jnp.dtype(a.dtype).itemsize
    bytes_accessed = (
        m_pad * H * itemsize(x2d)                       # x streamed in
        + m_pad * H * jnp.dtype(out_dtype).itemsize     # out streamed back
        + w1c.size * itemsize(w1c) + w2c.size * itemsize(w2c)
        + b1_2d.size * 4 + b2_2d.size * 4
    )
    cost = pl.CostEstimate(
        flops=4 * m_pad * H * mid,        # two matmuls: 2*M*H*mid each
        transcendentals=m_pad * mid,      # erf per hidden activation
        bytes_accessed=bytes_accessed,
    )

    out2d = pl.pallas_call(
        _cls_head_kernel,
        out_shape=jax.ShapeDtypeStruct((m_pad, H), out_dtype),
        grid_spec=pl.GridSpec(
            grid=(grid_m,),
            in_specs=[
                # x streams over M.
                pl.BlockSpec((tm, H), lambda i: (i, 0)),
                # Weights / biases resident in VMEM for the whole grid.
                pl.BlockSpec((H, mid), lambda i: (0, 0)),
                pl.BlockSpec((1, mid), lambda i: (0, 0)),
                pl.BlockSpec((mid, H), lambda i: (0, 0)),
                pl.BlockSpec((1, H), lambda i: (0, 0)),
            ],
            out_specs=pl.BlockSpec((tm, H), lambda i: (i, 0)),
        ),
        compiler_params=pltpu.CompilerParams(
            dimension_semantics=("parallel",),
        ),
        cost_estimate=cost,
    )(x2d, w1c, b1_2d, w2c, b2_2d)

    if m_pad != M:
        out2d = out2d[:M]
    return out2d.reshape(B, S, H)


def init_params(key, hidden_size, mid=384, dtype=jnp.float32):
    """Deterministic init mimicking nn.Linear's uniform(-1/sqrt(fan_in), 1/sqrt(fan_in))."""
    k1, k2, k3, k4 = jax.random.split(key, 4)
    bound1 = 1.0 / (hidden_size ** 0.5)
    bound2 = 1.0 / (mid ** 0.5)
    # Stored as (in_features, out_features) for the kernel.
    w1 = jax.random.uniform(k1, (hidden_size, mid), dtype, -bound1, bound1)
    b1 = jax.random.uniform(k2, (mid,), dtype, -bound1, bound1)
    w2 = jax.random.uniform(k3, (mid, hidden_size), dtype, -bound2, bound2)
    b2 = jax.random.uniform(k4, (hidden_size,), dtype, -bound2, bound2)
    return w1, b1, w2, b2


if __name__ == "__main__":
    # Small shapes consistent with the module: batch=2, seq=8, hidden=32
    B, S, H = 2, 8, 32
    key = jax.random.PRNGKey(0)
    kx, kp = jax.random.split(key)

    x = jax.random.normal(kx, (B, S, H), dtype=jnp.float32)
    w1, b1, w2, b2 = init_params(kp, H)

    out = simple_cls_head(x, w1, b1, w2, b2)
    out = jax.block_until_ready(out)

    # --- Reference 1: matched precision (bf16 MXU inputs, f32 accumulation) ---
    mm_dt = jnp.bfloat16
    x_bf = x.reshape(-1, H).astype(mm_dt)
    h_ref = jnp.dot(x_bf, w1.astype(mm_dt),
                    preferred_element_type=jnp.float32) + b1.astype(jnp.float32)
    g_ref = 0.5 * h_ref * (1.0 + jax.lax.erf(h_ref * jnp.float32(0.7071067811865476)))
    ref_matched = (jnp.dot(g_ref.astype(mm_dt), w2.astype(mm_dt),
                           preferred_element_type=jnp.float32)
                   + b2.astype(jnp.float32)).reshape(B, S, H)
    assert jnp.allclose(out, ref_matched, atol=1e-3, rtol=1e-3), \
        "mismatch vs matched-precision reference"

    # --- Reference 2: full-f32 torch semantics (loose bf16-appropriate tol) ---
    h32 = x.reshape(-1, H) @ w1 + b1
    g32 = 0.5 * h32 * (1.0 + jax.lax.erf(h32 / jnp.sqrt(2.0)))
    ref_f32 = (g32 @ w2 + b2).reshape(B, S, H)
    assert jnp.allclose(out, ref_f32, atol=1e-1, rtol=1e-1), \
        "mismatch vs f32 reference"

    print("KERNEL_OK")
</pallas_src>

<mosaic_0001>
module attributes {stable_mosaic.version = 11 : i64} {
  func.func @_cls_head_kernel(%arg0: i32, %arg1: memref<16x32xbf16, #tpu.memory_space<vmem>>, %arg2: memref<32x384xbf16, #tpu.memory_space<vmem>>, %arg3: memref<1x384xf32, #tpu.memory_space<vmem>>, %arg4: memref<384x32xbf16, #tpu.memory_space<vmem>>, %arg5: memref<1x32xf32, #tpu.memory_space<vmem>>, %arg6: memref<16x32xf32, #tpu.memory_space<vmem>>) attributes {dimension_semantics = [#tpu.dimension_semantics<parallel>], iteration_bounds = array<i64: 1>, scalar_prefetch = 0 : i64, scratch_operands = 0 : i64, tpu.core_type = #tpu.core_type<tc>, window_params = [{transform_indices = @transform_0, window_bounds = array<i64: 16, 32>}, {pipeline_mode = #tpu.pipeline_mode<synchronous>, transform_indices = @transform_1, window_bounds = array<i64: 32, 384>}, {pipeline_mode = #tpu.pipeline_mode<synchronous>, transform_indices = @transform_2, window_bounds = array<i64: 1, 384>}, {pipeline_mode = #tpu.pipeline_mode<synchronous>, transform_indices = @transform_3, window_bounds = array<i64: 384, 32>}, {pipeline_mode = #tpu.pipeline_mode<synchronous>, transform_indices = @transform_4, window_bounds = array<i64: 1, 32>}, {transform_indices = @transform_5, window_bounds = array<i64: 16, 32>}]} {
    %c0 = arith.constant 0 : index
    %c0_0 = arith.constant 0 : index
    %0 = vector.load %arg1[%c0, %c0_0] : memref<16x32xbf16, #tpu.memory_space<vmem>>, vector<16x32xbf16>
    %c0_1 = arith.constant 0 : index
    %c0_2 = arith.constant 0 : index
    %1 = vector.load %arg2[%c0_1, %c0_2] : memref<32x384xbf16, #tpu.memory_space<vmem>>, vector<32x384xbf16>
    %cst = arith.constant dense<0.000000e+00> : vector<16x384xf32>
    %2 = tpu.matmul %0, %1, %cst {dimension_numbers = #tpu.dot_dimension_numbers<[1], [0], [0], [1], [0, 0, 1, 1], [], []>} : vector<16x32xbf16>, vector<32x384xbf16>, vector<16x384xf32> -> vector<16x384xf32>
    %c0_3 = arith.constant 0 : index
    %c0_4 = arith.constant 0 : index
    %3 = vector.load %arg3[%c0_3, %c0_4] : memref<1x384xf32, #tpu.memory_space<vmem>>, vector<1x384xf32>
    %4 = vector.broadcast %3 : vector<1x384xf32> to vector<16x384xf32>
    %5 = arith.addf %2, %4 : vector<16x384xf32>
    %cst_5 = arith.constant 5.000000e-01 : f32
    %6 = vector.broadcast %cst_5 : f32 to vector<16x384xf32>
    %7 = arith.mulf %6, %5 : vector<16x384xf32>
    %cst_6 = arith.constant 0.707106769 : f32
    %8 = vector.broadcast %cst_6 : f32 to vector<16x384xf32>
    %9 = arith.mulf %5, %8 : vector<16x384xf32>
    %10 = math.erf %9 : vector<16x384xf32>
    %cst_7 = arith.constant 1.000000e+00 : f32
    %11 = vector.broadcast %cst_7 : f32 to vector<16x384xf32>
    %12 = arith.addf %11, %10 : vector<16x384xf32>
    %13 = arith.mulf %7, %12 : vector<16x384xf32>
    %14 = arith.truncf %13 : vector<16x384xf32> to vector<16x384xbf16>
    %c0_8 = arith.constant 0 : index
    %c0_9 = arith.constant 0 : index
    %15 = vector.load %arg4[%c0_8, %c0_9] : memref<384x32xbf16, #tpu.memory_space<vmem>>, vector<384x32xbf16>
    %cst_10 = arith.constant dense<0.000000e+00> : vector<16x32xf32>
    %16 = tpu.matmul %14, %15, %cst_10 {dimension_numbers = #tpu.dot_dimension_numbers<[1], [0], [0], [1], [0, 0, 1, 1], [], []>} : vector<16x384xbf16>, vector<384x32xbf16>, vector<16x32xf32> -> vector<16x32xf32>
    %c0_11 = arith.constant 0 : index
    %c0_12 = arith.constant 0 : index
    %17 = vector.load %arg5[%c0_11, %c0_12] : memref<1x32xf32, #tpu.memory_space<vmem>>, vector<1x32xf32>
    %18 = vector.broadcast %17 : vector<1x32xf32> to vector<16x32xf32>
    %19 = arith.addf %16, %18 : vector<16x32xf32>
    %c0_13 = arith.constant 0 : index
    %c0_14 = arith.constant 0 : index
    %20 = vector.load %arg6[%c0_13, %c0_14] : memref<16x32xf32, #tpu.memory_space<vmem>>, vector<16x32xf32>
    tpu.vector_store %arg6[%c0_13, %c0_14], %19 {strides = array<i32>} : memref<16x32xf32, #tpu.memory_space<vmem>>, vector<16x32xf32>,
    return
  }
  func.func @transform_0(%arg0: i32) -> (i32, i32) {
    %c0_i32 = arith.constant 0 : i32
    %c0_i32_0 = arith.constant 0 : i32
    return %arg0, %c0_i32 : i32, i32
  }
  func.func @transform_1(%arg0: i32) -> (i32, i32) {
    %c0_i32 = arith.constant 0 : i32
    %c0_i32_0 = arith.constant 0 : i32
    %c0_i32_1 = arith.constant 0 : i32
    return %c0_i32, %c0_i32_0 : i32, i32
  }
  func.func @transform_2(%arg0: i32) -> (i32, i32) {
    %c0_i32 = arith.constant 0 : i32
    %c0_i32_0 = arith.constant 0 : i32
    %c0_i32_1 = arith.constant 0 : i32
    return %c0_i32, %c0_i32_0 : i32, i32
  }
  func.func @transform_3(%arg0: i32) -> (i32, i32) {
    %c0_i32 = arith.constant 0 : i32
    %c0_i32_0 = arith.constant 0 : i32
    %c0_i32_1 = arith.constant 0 : i32
    return %c0_i32, %c0_i32_0 : i32, i32
  }
  func.func @transform_4(%arg0: i32) -> (i32, i32) {
    %c0_i32 = arith.constant 0 : i32
    %c0_i32_0 = arith.constant 0 : i32
    %c0_i32_1 = arith.constant 0 : i32
    return %c0_i32, %c0_i32_0 : i32, i32
  }
  func.func @transform_5(%arg0: i32) -> (i32, i32) {
    %c0_i32 = arith.constant 0 : i32
    %c0_i32_0 = arith.constant 0 : i32
    return %arg0, %c0_i32 : i32, i32
  }
}

</mosaic_0001>

<llo_original>
// kernel: tpu_custom_call.1
$region0: #{tpu_custom_call.1}
  #allocation0 [shape = 'u32[]', space=smem, size = 0x4, offset = 0x4, fixed_abs, tag = 'smem constant byte address 0x4 - core index']
  #allocation1 [shape = 'u32[144,128]{1,0:T(1,128)}', space=vmem, size = 0x12000, scoped, tag = 'internal scratch']
  %s0 = inlined_call_operand.vmem [shape: bf16[16,32], index: 0, kind: input, shape index: {}]
  %s1 = inlined_call_operand.vmem [shape: bf16[32,384], index: 1, kind: input, shape index: {}]
  %s2 = inlined_call_operand.vmem [shape: f32[1,384], index: 2, kind: input, shape index: {}]
  %s3 = inlined_call_operand.vmem [shape: bf16[384,32], index: 3, kind: input, shape index: {}]
  %s4 = inlined_call_operand.vmem [shape: f32[1,32], index: 4, kind: input, shape index: {}]
  %s5 = inlined_call_operand.hbm [shape: f32[16,32], index: 5, kind: output, shape index: {}]
  %s6 = sld [smem:[#allocation0]]
  $region30: #{tpu_custom_call.1} parent=0
    _
  %s8 = ssub.s32 1, %s6
  %s9 = scalar_select 0, %s8, %s6
  $region1: #{tpu_custom_call.1} parent=0
    #allocation2 [shape = 'u8[8192]{0}', space=vmem, size = 0x2000, scoped, tag = 'output window, operand 0, single buffered']
    #allocation3 [shape = 's32[1]{0}', space=sflag, size = 0x4, scoped, tag = 'scoped memory for tpu_custom_call.1']
    %10 = vsyncpa [#allocation3], 0
    // Predicated region
    $region2: #{tpu_custom_call.1} parent=1 // pred_check
      _
    $region3: #{tpu_custom_call.1} parent=1 // pred_check_branch
      %12 = sbr.rel (0) target = $region5
    $region4: #{tpu_custom_call.1} parent=1 // pred_region
      _
    $region5: #{tpu_custom_call.1} parent=1 // pred_fallthru
      _
    // Predicated region
    $region6: #{tpu_custom_call.1} parent=1 // pred_check
      _
    $region7: #{tpu_custom_call.1} parent=1 // pred_check_branch
      %14 = sbr.rel (0) target = $region9
    $region8: #{tpu_custom_call.1} parent=1 // pred_region
      _
    $region9: #{tpu_custom_call.1} parent=1 // pred_fallthru
      _
    // Predicated region
    $region10: #{tpu_custom_call.1} parent=1 // pred_check
      _
    $region11: #{tpu_custom_call.1} parent=1 // pred_check_branch
      %16 = sbr.rel (0) target = $region13
    $region12: #{tpu_custom_call.1} parent=1 // pred_region
      _
    $region13: #{tpu_custom_call.1} parent=1 // pred_fallthru
      _
    // Predicated region
    $region14: #{tpu_custom_call.1} parent=1 // pred_check
      _
    $region15: #{tpu_custom_call.1} parent=1 // pred_check_branch
      %18 = sbr.rel (0) target = $region17
    $region16: #{tpu_custom_call.1} parent=1 // pred_region
      _
    $region17: #{tpu_custom_call.1} parent=1 // pred_fallthru
      _
    // Predicated region
    $region18: #{tpu_custom_call.1} parent=1 // pred_check
      _
    $region19: #{tpu_custom_call.1} parent=1 // pred_check_branch
      %20 = sbr.rel (0) target = $region21
    $region20: #{tpu_custom_call.1} parent=1 // pred_region
      _
    $region21: #{tpu_custom_call.1} parent=1 // pred_fallthru
      _
    %v22 = vld [vmem:[%s0] sm:$0xf]
    %v23 = vld [vmem:[%s0 + $0x4] sm:$0xf]
    %v24 = vld [vmem:[%s1] sm:$0xff]
    %v25 = vld [vmem:[%s1 + $0x8] sm:$0xf]
    %v26 = vld [vmem:[%s1 + $0xc] sm:$0xff]
    %v27 = vld [vmem:[%s1 + $0x14] sm:$0xf]
    %v28 = vld [vmem:[%s1 + $0x18] sm:$0xff]
    %v29 = vld [vmem:[%s1 + $0x20] sm:$0xf]
    %v30 = vld [vmem:[%s1 + $0x24] sm:$0xff]
    %v31 = vld [vmem:[%s1 + $0x2c] sm:$0xf]
    %v32 = vld [vmem:[%s2] sm:$0x7]
    %v34 = vlaneseq
    %v35 = vshrl.u32 %v34, 7
    %v36 = vsub.s32 0, %v35
    %v37 = vrot.slane %v32, %v36
    %v38 = vlaneseq
    %v39 = vshrl.u32 %v38, 7
    %v40 = vsub.s32 1, %v39
    %v41 = vrot.slane %v32, %v40
    %v42 = vlaneseq
    %v43 = vshrl.u32 %v42, 7
    %v44 = vsub.s32 2, %v43
    %v45 = vrot.slane %v32, %v44
    %v51 = vunpack.c.l.b16 %v22
    %v52 = vunpack.c.l.b16 %v23
    %v53 = vpack.c.b16 %v52, %v51
    %v62 = vunpack.c.l.b16 %v24
    %v63 = vunpack.c.h.b16 %v24
    %v64 = vunpack.c.l.b16 %v25
    %v65 = vunpack.c.l.b16 %v26
    %v66 = vunpack.c.h.b16 %v26
    %v67 = vunpack.c.l.b16 %v27
    %v68 = vunpack.c.l.b16 %v28
    %v69 = vunpack.c.h.b16 %v28
    %v70 = vunpack.c.l.b16 %v29
    %v71 = vunpack.c.l.b16 %v30
    %v72 = vunpack.c.h.b16 %v30
    %v73 = vunpack.c.l.b16 %v31
    %v74 = vpack.c.b16 %v65, %v62
    %v75 = vpack.c.b16 %v66, %v63
    %v76 = vpack.c.b16 %v67, %v64
    %v77 = vpack.c.b16 %v71, %v68
    %v78 = vpack.c.b16 %v72, %v69
    %v79 = vpack.c.b16 %v73, %v70
    %vm86 = vcmask 261120
    %v88 = vsel %vm86, %v53, 0
    %90 = vmatprep.subr.bf16.mxu0 0
    %91 = vmatpush1.bf16.msra.mxu0 0
    %92 = vmatprep.subr.bf16.mxu0 0
    %93 = vmatpush1.bf16.msra.mxu0 0
    %94 = vmatprep.subr.bf16.mxu0 0
    %95 = vmatpush1.bf16.msra.mxu0 0
    %96 = vmatprep.subr.bf16.mxu0 0
    %97 = vmatpush1.bf16.msra.mxu0 0
    %98 = vmatprep.subr.bf16.mxu0 0
    %99 = vmatpush1.bf16.msra.mxu0 0
    %100 = vmatprep.subr.bf16.mxu0 0
    %101 = vmatpush1.bf16.msra.mxu0 0
    %102 = vmatprep.subr.bf16.mxu0 %v78
    %103 = vmatpush1.bf16.msra.mxu0 %v77
    %104 = vmatprep.subr.bf16.mxu0 %v75
    %105 = vmatpush1.bf16.msra.mxu0 %v74
    %106 = vmatprep.subr.bf16.mxu0 0
    %107 = vmatpush2.bf16.msra.mxu0 0
    %108 = vmatprep.subr.bf16.mxu0 0
    %109 = vmatpush2.bf16.msra.mxu0 0
    %110 = vmatprep.subr.bf16.mxu0 0
    %111 = vmatpush2.bf16.msra.mxu0 0
    %112 = vmatprep.subr.bf16.mxu0 0
    %113 = vmatpush2.bf16.msra.mxu0 0
    %114 = vmatprep.subr.bf16.mxu0 0
    %115 = vmatpush2.bf16.msra.mxu0 0
    %116 = vmatprep.subr.bf16.mxu0 0
    %117 = vmatpush2.bf16.msra.mxu0 0
    %118 = vmatprep.subr.bf16.mxu0 0
    %119 = vmatpush2.bf16.msra.mxu0 0
    %120 = vmatprep.subr.bf16.mxu0 0
    %121 = vmatpush2.bf16.msra.mxu0 0
    %122 = vmatprep.mubr.bf16.mxu0 0
    %123 = vmatmul.mubr.bf16.gmra.mxu0 %v88
    %v124 = vpop.f32.mrf.mxu0
    %v125 = vadd.f32 %v37, %v124
    %v126 = vpop.f32.mrf.mxu0
    %v127 = vadd.f32 %v41, %v126
    %v128 = vpop.f32.mrf.mxu0
    %v129 = vadd.f32 %v37, %v128
    %v130 = vpop.f32.mrf.mxu0
    %v131 = vadd.f32 %v41, %v130
    %132 = vdwg.mxu0
    %133 = vmatprep.subr.bf16.mxu0 0
    %134 = vmatpush1.bf16.msra.mxu0 0
    %135 = vmatprep.subr.bf16.mxu0 0
    %136 = vmatpush1.bf16.msra.mxu0 0
    %137 = vmatprep.subr.bf16.mxu0 0
    %138 = vmatpush1.bf16.msra.mxu0 0
    %139 = vmatprep.subr.bf16.mxu0 0
    %140 = vmatpush1.bf16.msra.mxu0 0
    %141 = vmatprep.subr.bf16.mxu0 0
    %142 = vmatpush1.bf16.msra.mxu0 0
    %143 = vmatprep.subr.bf16.mxu0 0
    %144 = vmatpush1.bf16.msra.mxu0 0
    %145 = vmatprep.subr.bf16.mxu0 0
    %146 = vmatpush1.bf16.msra.mxu0 %v79
    %147 = vmatprep.subr.bf16.mxu0 0
    %148 = vmatpush1.bf16.msra.mxu0 %v76
    %149 = vmatprep.subr.bf16.mxu0 0
    %150 = vmatpush2.bf16.msra.mxu0 0
    %151 = vmatprep.subr.bf16.mxu0 0
    %152 = vmatpush2.bf16.msra.mxu0 0
    %153 = vmatprep.subr.bf16.mxu0 0
    %154 = vmatpush2.bf16.msra.mxu0 0
    %155 = vmatprep.subr.bf16.mxu0 0
    %156 = vmatpush2.bf16.msra.mxu0 0
    %157 = vmatprep.subr.bf16.mxu0 0
    %158 = vmatpush2.bf16.msra.mxu0 0
    %159 = vmatprep.subr.bf16.mxu0 0
    %160 = vmatpush2.bf16.msra.mxu0 0
    %161 = vmatprep.subr.bf16.mxu0 0
    %162 = vmatpush2.bf16.msra.mxu0 0
    %163 = vmatprep.subr.bf16.mxu0 0
    %164 = vmatpush2.bf16.msra.mxu0 0
    %165 = vmatprep.mubr.bf16.mxu0 0
    %166 = vmatmul.mubr.bf16.gmra.mxu0 %v88
    %v167 = vpop.f32.mrf.mxu0
    %v168 = vadd.f32 %v45, %v167
    %v169 = vpop.f32.mrf.mxu0
    %v170 = vpop.f32.mrf.mxu0
    %v171 = vadd.f32 %v45, %v170
    %v172 = vpop.f32.mrf.mxu0
    %173 = vdwg.mxu0
    %v174 = vmul.f32 %v125, 0.5
    %v175 = vmul.f32 %v127, 0.5
    %v176 = vmul.f32 %v168, 0.5
    %v177 = vmul.f32 %v129, 0.5
    %v178 = vmul.f32 %v131, 0.5
    %v179 = vmul.f32 %v171, 0.5
    %v180 = vmul.f32 %v125, 0.70710677
    %v181 = vmul.f32 %v127, 0.70710677
    %v182 = vmul.f32 %v168, 0.70710677
    %v183 = vmul.f32 %v129, 0.70710677
    %v184 = vmul.f32 %v131, 0.70710677
    %v185 = vmul.f32 %v171, 0.70710677
    %v186 = verf.f32.pop %v180
    %v187 = verf.f32.pop %v181
    %v188 = verf.f32.pop %v182
    %v189 = verf.f32.pop %v183
    %v190 = verf.f32.pop %v184
    %v191 = verf.f32.pop %v185
    %v192 = vadd.f32 %v186, 1.0
    %v193 = vadd.f32 %v187, 1.0
    %v194 = vadd.f32 %v188, 1.0
    %v195 = vadd.f32 %v189, 1.0
    %v196 = vadd.f32 %v190, 1.0
    %v197 = vadd.f32 %v191, 1.0
    %v198 = vmul.f32 %v174, %v192
    %v199 = vmul.f32 %v175, %v193
    %v200 = vmul.f32 %v176, %v194
    %v201 = vmul.f32 %v177, %v195
    %v202 = vmul.f32 %v178, %v196
    %v203 = vmul.f32 %v179, %v197
    %v204 = vpack.c.bf16 %v201, %v198
    %v205 = vpack.c.bf16 %v202, %v199
    %v206 = vpack.c.bf16 %v203, %v200
    %v207 = vld [vmem:[%s3] sm:$0xf]
    %v208 = vld [vmem:[%s3 + $0x4] sm:$0xf]
    %v209 = vld [vmem:[%s3 + $0x8] sm:$0xf]
    %v210 = vld [vmem:[%s3 + $0xc] sm:$0xf]
    %v211 = vld [vmem:[%s3 + $0x10] sm:$0xf]
    %v212 = vld [vmem:[%s3 + $0x14] sm:$0xf]
    %v213 = vld [vmem:[%s3 + $0x18] sm:$0xf]
    %v214 = vld [vmem:[%s3 + $0x1c] sm:$0xf]
    %v215 = vld [vmem:[%s3 + $0x20] sm:$0xf]
    %v216 = vld [vmem:[%s3 + $0x24] sm:$0xf]
    %v217 = vld [vmem:[%s3 + $0x28] sm:$0xf]
    %v218 = vld [vmem:[%s3 + $0x2c] sm:$0xf]
    %v219 = vld [vmem:[%s3 + $0x30] sm:$0xf]
    %v220 = vld [vmem:[%s3 + $0x34] sm:$0xf]
    %v221 = vld [vmem:[%s3 + $0x38] sm:$0xf]
    %v222 = vld [vmem:[%s3 + $0x3c] sm:$0xf]
    %v223 = vld [vmem:[%s3 + $0x40] sm:$0xf]
    %v224 = vld [vmem:[%s3 + $0x44] sm:$0xf]
    %v225 = vld [vmem:[%s3 + $0x48] sm:$0xf]
    %v226 = vld [vmem:[%s3 + $0x4c] sm:$0xf]
    %v227 = vld [vmem:[%s3 + $0x50] sm:$0xf]
    %v228 = vld [vmem:[%s3 + $0x54] sm:$0xf]
    %v229 = vld [vmem:[%s3 + $0x58] sm:$0xf]
    %v230 = vld [vmem:[%s3 + $0x5c] sm:$0xf]
    %v231 = vld [vmem:[%s3 + $0x60] sm:$0xf]
    %v232 = vld [vmem:[%s3 + $0x64] sm:$0xf]
    %v233 = vld [vmem:[%s3 + $0x68] sm:$0xf]
    %v234 = vld [vmem:[%s3 + $0x6c] sm:$0xf]
    %v235 = vld [vmem:[%s3 + $0x70] sm:$0xf]
    %v236 = vld [vmem:[%s3 + $0x74] sm:$0xf]
    %v237 = vld [vmem:[%s3 + $0x78] sm:$0xf]
    %v238 = vld [vmem:[%s3 + $0x7c] sm:$0xf]
    %v239 = vld [vmem:[%s3 + $0x80] sm:$0xf]
    %v240 = vld [vmem:[%s3 + $0x84] sm:$0xf]
    %v241 = vld [vmem:[%s3 + $0x88] sm:$0xf]
    %v242 = vld [vmem:[%s3 + $0x8c] sm:$0xf]
    %v243 = vld [vmem:[%s3 + $0x90] sm:$0xf]
    %v244 = vld [vmem:[%s3 + $0x94] sm:$0xf]
    %v245 = vld [vmem:[%s3 + $0x98] sm:$0xf]
    %v246 = vld [vmem:[%s3 + $0x9c] sm:$0xf]
    %v247 = vld [vmem:[%s3 + $0xa0] sm:$0xf]
    %v248 = vld [vmem:[%s3 + $0xa4] sm:$0xf]
    %v249 = vld [vmem:[%s3 + $0xa8] sm:$0xf]
    %v250 = vld [vmem:[%s3 + $0xac] sm:$0xf]
    %v251 = vld [vmem:[%s3 + $0xb0] sm:$0xf]
    %v252 = vld [vmem:[%s3 + $0xb4] sm:$0xf]
    %v253 = vld [vmem:[%s3 + $0xb8] sm:$0xf]
    %v254 = vld [vmem:[%s3 + $0xbc] sm:$0xf]
    %v255 = vld [vmem:[%s4] sm:$0x1]
    %v257 = vlaneseq
    %v258 = vshrl.u32 %v257, 7
    %v259 = vsub.s32 0, %v258
    %v260 = vrot.slane %v255, %v259
    %v310 = vunpack.c.l.b16 %v207
    %v311 = vunpack.c.l.b16 %v208
    %v312 = vunpack.c.l.b16 %v209
    %v313 = vunpack.c.l.b16 %v210
    %v314 = vunpack.c.l.b16 %v211
    %v315 = vunpack.c.l.b16 %v212
    %v316 = vunpack.c.l.b16 %v213
    %v317 = vunpack.c.l.b16 %v214
    %v318 = vunpack.c.l.b16 %v215
    %v319 = vunpack.c.l.b16 %v216
    %v320 = vunpack.c.l.b16 %v217
    %v321 = vunpack.c.l.b16 %v218
    %v322 = vunpack.c.l.b16 %v219
    %v323 = vunpack.c.l.b16 %v220
    %v324 = vunpack.c.l.b16 %v221
    %v325 = vunpack.c.l.b16 %v222
    %v326 = vunpack.c.l.b16 %v223
    %v327 = vunpack.c.l.b16 %v224
    %v328 = vunpack.c.l.b16 %v225
    %v329 = vunpack.c.l.b16 %v226
    %v330 = vunpack.c.l.b16 %v227
    %v331 = vunpack.c.l.b16 %v228
    %v332 = vunpack.c.l.b16 %v229
    %v333 = vunpack.c.l.b16 %v230
    %v334 = vunpack.c.l.b16 %v231
    %v335 = vunpack.c.l.b16 %v232
    %v336 = vunpack.c.l.b16 %v233
    %v337 = vunpack.c.l.b16 %v234
    %v338 = vunpack.c.l.b16 %v235
    %v339 = vunpack.c.l.b16 %v236
    %v340 = vunpack.c.l.b16 %v237
    %v341 = vunpack.c.l.b16 %v238
    %v342 = vunpack.c.l.b16 %v239
    %v343 = vunpack.c.l.b16 %v240
    %v344 = vunpack.c.l.b16 %v241
    %v345 = vunpack.c.l.b16 %v242
    %v346 = vunpack.c.l.b16 %v243
    %v347 = vunpack.c.l.b16 %v244
    %v348 = vunpack.c.l.b16 %v245
    %v349 = vunpack.c.l.b16 %v246
    %v350 = vunpack.c.l.b16 %v247
    %v351 = vunpack.c.l.b16 %v248
    %v352 = vunpack.c.l.b16 %v249
    %v353 = vunpack.c.l.b16 %v250
    %v354 = vunpack.c.l.b16 %v251
    %v355 = vunpack.c.l.b16 %v252
    %v356 = vunpack.c.l.b16 %v253
    %v357 = vunpack.c.l.b16 %v254
    %v358 = vpack.c.b16 %v311, %v310
    %v359 = vpack.c.b16 %v313, %v312
    %v360 = vpack.c.b16 %v315, %v314
    %v361 = vpack.c.b16 %v317, %v316
    %v362 = vpack.c.b16 %v319, %v318
    %v363 = vpack.c.b16 %v321, %v320
    %v364 = vpack.c.b16 %v323, %v322
    %v365 = vpack.c.b16 %v325, %v324
    %v366 = vpack.c.b16 %v327, %v326
    %v367 = vpack.c.b16 %v329, %v328
    %v368 = vpack.c.b16 %v331, %v330
    %v369 = vpack.c.b16 %v333, %v332
    %v370 = vpack.c.b16 %v335, %v334
    %v371 = vpack.c.b16 %v337, %v336
    %v372 = vpack.c.b16 %v339, %v338
    %v373 = vpack.c.b16 %v341, %v340
    %v374 = vpack.c.b16 %v343, %v342
    %v375 = vpack.c.b16 %v345, %v344
    %v376 = vpack.c.b16 %v347, %v346
    %v377 = vpack.c.b16 %v349, %v348
    %v378 = vpack.c.b16 %v351, %v350
    %v379 = vpack.c.b16 %v353, %v352
    %v380 = vpack.c.b16 %v355, %v354
    %v381 = vpack.c.b16 %v357, %v356
    %406 = vmatprep.subr.bf16.mxu0 0
    %407 = vmatpush1.bf16.msra.mxu0 %v365
    %408 = vmatprep.subr.bf16.mxu0 0
    %409 = vmatpush1.bf16.msra.mxu0 %v364
    %410 = vmatprep.subr.bf16.mxu0 0
    %411 = vmatpush1.bf16.msra.mxu0 %v363
    %412 = vmatprep.subr.bf16.mxu0 0
    %413 = vmatpush1.bf16.msra.mxu0 %v362
    %414 = vmatprep.subr.bf16.mxu0 0
    %415 = vmatpush1.bf16.msra.mxu0 %v361
    %416 = vmatprep.subr.bf16.mxu0 0
    %417 = vmatpush1.bf16.msra.mxu0 %v360
    %418 = vmatprep.subr.bf16.mxu0 0
    %419 = vmatpush1.bf16.msra.mxu0 %v359
    %420 = vmatprep.subr.bf16.mxu0 0
    %421 = vmatpush1.bf16.msra.mxu0 %v358
    %422 = vmatprep.subr.bf16.mxu0 0
    %423 = vmatpush2.bf16.msra.mxu0 %v373
    %424 = vmatprep.subr.bf16.mxu0 0
    %425 = vmatpush2.bf16.msra.mxu0 %v372
    %426 = vmatprep.subr.bf16.mxu0 0
    %427 = vmatpush2.bf16.msra.mxu0 %v371
    %428 = vmatprep.subr.bf16.mxu0 0
    %429 = vmatpush2.bf16.msra.mxu0 %v370
    %430 = vmatprep.subr.bf16.mxu0 0
    %431 = vmatpush2.bf16.msra.mxu0 %v369
    %432 = vmatprep.subr.bf16.mxu0 0
    %433 = vmatpush2.bf16.msra.mxu0 %v368
    %434 = vmatprep.subr.bf16.mxu0 0
    %435 = vmatpush2.bf16.msra.mxu0 %v367
    %436 = vmatprep.subr.bf16.mxu0 0
    %437 = vmatpush2.bf16.msra.mxu0 %v366
    %438 = vmatprep.mubr.bf16.mxu0 %v205
    %439 = vmatmul.mubr.bf16.gmra.mxu0 %v204
    %v440 = vpop.f32.mrf.mxu0
    %v441 = vadd.f32 %v260, %v440
    %v442 = vpop.f32.mrf.mxu0
    %v443 = vpop.f32.mrf.mxu0
    %v444 = vadd.f32 %v260, %v443
    %v445 = vpop.f32.mrf.mxu0
    %446 = vdwg.mxu0
    %447 = vmatprep.subr.bf16.mxu0 0
    %448 = vmatpush1.bf16.msra.mxu0 %v381
    %449 = vmatprep.subr.bf16.mxu0 0
    %450 = vmatpush1.bf16.msra.mxu0 %v380
    %451 = vmatprep.subr.bf16.mxu0 0
    %452 = vmatpush1.bf16.msra.mxu0 %v379
    %453 = vmatprep.subr.bf16.mxu0 0
    %454 = vmatpush1.bf16.msra.mxu0 %v378
    %455 = vmatprep.subr.bf16.mxu0 0
    %456 = vmatpush1.bf16.msra.mxu0 %v377
    %457 = vmatprep.subr.bf16.mxu0 0
    %458 = vmatpush1.bf16.msra.mxu0 %v376
    %459 = vmatprep.subr.bf16.mxu0 0
    %460 = vmatpush1.bf16.msra.mxu0 %v375
    %461 = vmatprep.subr.bf16.mxu0 0
    %462 = vmatpush1.bf16.msra.mxu0 %v374
    %463 = vmatprep.subr.bf16.mxu0 0
    %464 = vmatpush2.bf16.msra.mxu0 0
    %465 = vmatprep.subr.bf16.mxu0 0
    %466 = vmatpush2.bf16.msra.mxu0 0
    %467 = vmatprep.subr.bf16.mxu0 0
    %468 = vmatpush2.bf16.msra.mxu0 0
    %469 = vmatprep.subr.bf16.mxu0 0
    %470 = vmatpush2.bf16.msra.mxu0 0
    %471 = vmatprep.subr.bf16.mxu0 0
    %472 = vmatpush2.bf16.msra.mxu0 0
    %473 = vmatprep.subr.bf16.mxu0 0
    %474 = vmatpush2.bf16.msra.mxu0 0
    %475 = vmatprep.subr.bf16.mxu0 0
    %476 = vmatpush2.bf16.msra.mxu0 0
    %477 = vmatprep.subr.bf16.mxu0 0
    %478 = vmatpush2.bf16.msra.mxu0 0
    %479 = vmatprep.mubr.bf16.mxu0 0
    %480 = vmatmul.mubr.bf16.gmra.mxu0 %v206
    %v481 = vpop.f32.mrf.mxu0
    %v482 = vadd.f32 %v441, %v481
    %v483 = vpop.f32.mrf.mxu0
    %v484 = vpop.f32.mrf.mxu0
    %v485 = vadd.f32 %v444, %v484
    %v486 = vpop.f32.mrf.mxu0
    %487 = vdwg.mxu0
    %488 = vst.msk [vmem:[#allocation2] sm:$0xff] %vm86, %v482
    %489 = vst.msk [vmem:[#allocation2 + $0x8] sm:$0xff] %vm86, %v485
    // Predicated region
    $region22: #{tpu_custom_call.1} parent=1 // pred_check
      _
    $region23: #{tpu_custom_call.1} parent=1 // pred_check_branch
      %491 = sbr.rel (0) target = $region25
    $region24: #{tpu_custom_call.1} parent=1 // pred_region
      %s493 = ssub.s32 256, 256
      %494 = vsyncadd [#allocation3], %s493
      %s495 = sshll.u32 [#allocation2], 4
      %s496 = int_to_ptr.vmem [resolvable:$true] %s495
      %501 = dma.vmem_to_hbm [thread:$0]  %s496, 256, %s5, [#allocation3], 128, 128, 8
    $region25: #{tpu_custom_call.1} parent=1 // pred_fallthru
      _
    // Predicated region
    $region26: #{tpu_custom_call.1} parent=1 // pred_check
      _
    $region27: #{tpu_custom_call.1} parent=1 // pred_check_branch
      %503 = sbr.rel (0) target = $region29
    $region28: #{tpu_custom_call.1} parent=1 // pred_region
      %504 = dma.done [#allocation3], 256
    $region29: #{tpu_custom_call.1} parent=1 // pred_fallthru
      _
    %505 = vsyncpa [#allocation3], 1

</llo_original>
